<compile_context>
chip_gen: v7x
topology: tpu7x:2x2x1
jax: 0.10.0
libtpu: 0.0.40
codegen_flags: <defaults>
</compile_context>

<pallas_src>
import math

import jax
import jax.numpy as jnp
from jax.experimental import pallas as pl
from jax.experimental.pallas import tpu as pltpu


# ---------------------------------------------------------------------------
# Buffer construction (deterministic, matches nn.Module.__init__)
# ---------------------------------------------------------------------------
def make_positional_encoding_table(d_model: int, max_len: int = 5000) -> jnp.ndarray:
    """Builds the (max_len, d_model) sinusoidal table, identical to the torch code."""
    position = jnp.arange(0, max_len, dtype=jnp.float32)[:, None]
    div_term = jnp.exp(
        jnp.arange(0, d_model, 2, dtype=jnp.float32) * (-math.log(10000.0) / d_model)
    )
    angles = position * div_term                               # (max_len, ceil(d/2))
    pe = jnp.zeros((max_len, d_model), dtype=jnp.float32)
    pe = pe.at[:, 0::2].set(jnp.sin(angles))
    n_odd = pe[:, 1::2].shape[1]                               # d_model // 2
    pe = pe.at[:, 1::2].set(jnp.cos(angles)[:, :n_odd])        # odd d_model tolerated
    return pe


# ---------------------------------------------------------------------------
# Kernel body (shared by the 2-D and 3-D layouts; broadcasting handles both)
# ---------------------------------------------------------------------------
def _pe_add_kernel(x_ref, pe_ref, o_ref):
    # fp32 add (pe buffer is fp32) so bf16/f16 inputs follow torch's type
    # promotion; casts are no-ops for fp32 x and hidden behind HBM traffic.
    o_ref[...] = (
        x_ref[...].astype(jnp.float32) + pe_ref[...].astype(jnp.float32)
    ).astype(o_ref.dtype)


# ---------------------------------------------------------------------------
# Layout / tiling helpers
# ---------------------------------------------------------------------------
def _choose_layout(batch: int, d_model: int):
    """Pick a lane/sublane-dense view of (S, B, D). Returns (mode, fold)."""
    lane_dense = d_model % 128 == 0
    if lane_dense and batch >= 8:
        return "3d", 1
    if not lane_dense:
        k = 128 // math.gcd(d_model, 128)          # smallest k with (k*D) % 128 == 0
        if batch % k == 0 and batch // k >= 8:
            return "3d", k                          # fold k batch rows into lanes
    if batch <= 8 and batch * d_model <= 16384:
        return "2d", batch                          # small batch: flat (S, B*D) rows
    return "3d", 1                                  # fallback: correct, some padding


def _vmem_limit(x_blk_bytes: int, out_blk_bytes: int, pe_blk_bytes: int) -> int:
    # Double-buffered x/out + pe + slack. Explicit so v5e's 16 MiB scoped default
    # doesn't force re-tiling; capped well under v7x's 64 MiB physical VMEM.
    need = 2 * (x_blk_bytes + out_blk_bytes) + 2 * pe_blk_bytes + (2 << 20)
    return int(min(max(need, 32 << 20), 48 << 20))


# ---------------------------------------------------------------------------
# Forward wrapper
# ---------------------------------------------------------------------------
def positional_encoding_forward(
    x: jnp.ndarray,
    pe_table: jnp.ndarray,
    *,
    block_budget_bytes: int = 4 << 20,   # ~4 MiB/buffer: near HBM roofline on all gens
    donate_x: bool = False,
) -> jnp.ndarray:
    """x: (seq_len, batch, d_model); pe_table: (max_len, d_model) fp32 buffer."""
    seq_len, batch, d_model = x.shape
    if seq_len > pe_table.shape[0]:
        raise ValueError(f"seq_len {seq_len} exceeds pe max_len {pe_table.shape[0]}")
    if pe_table.shape[1] != d_model:
        raise ValueError("pe_table d_model mismatch")

    out_dtype = jnp.promote_types(x.dtype, pe_table.dtype)   # torch-style promotion
    pe_slice = pe_table[:seq_len, :]                          # fp32, tiny, reused DMA
    # NOTE: under jax.jit the slice / tile / reshape plumbing below fuses and is
    # cached per (seq_len, shape) trace; callers on a hot path should jit this fn.
    x_isz = jnp.dtype(x.dtype).itemsize
    o_isz = jnp.dtype(out_dtype).itemsize
    pe_isz = jnp.dtype(pe_slice.dtype).itemsize

    mode, fold = _choose_layout(batch, d_model)

    if mode == "2d":
        # Flat (S, B*D): sublane dim is seq (dense), lane dim is B*D (full dim ->
        # layout-legal). pe duplicated `batch` times; cheap for the small-batch
        # shapes that take this path.
        width = batch * d_model
        x_v = x.reshape(seq_len, width)               # trailing-dim collapse, no relayout
        pe_v = pe_slice if batch == 1 else jnp.tile(pe_slice, (1, batch))
        rows = max(1, block_budget_bytes // max(width * x_isz, 1))
        tile_s = seq_len if rows >= seq_len else min(seq_len, max(8, (rows // 8) * 8))
        # Degenerate-grid guard (v7x has 2 TCs): give the parallel axis >= 2 steps
        # when it can be done with a layout-legal (multiple-of-8) seq tile.
        if pl.cdiv(seq_len, tile_s) < 2 and seq_len >= 16:
            tile_s = min(tile_s, ((pl.cdiv(seq_len, 2) + 7) // 8) * 8)
        grid = (pl.cdiv(seq_len, tile_s),)
        in_specs = [
            pl.BlockSpec((tile_s, width), lambda i: (i, 0)),
            pl.BlockSpec((tile_s, width), lambda i: (i, 0)),
        ]
        out_specs = pl.BlockSpec((tile_s, width), lambda i: (i, 0))
        out_shape = jax.ShapeDtypeStruct((seq_len, width), out_dtype)
        dims = ("parallel",)
        x_blk = tile_s * width * x_isz
        o_blk = tile_s * width * o_isz
        pe_blk = tile_s * width * pe_isz
    else:
        # 3-D (S, B/fold, fold*D): lane dim is fold*D (multiple of 128 when folded,
        # else full dim), sublane dim is the batch tile (multiple of 8 or full).
        b_eff, d_eff = batch // fold, d_model * fold
        x_v = x.reshape(seq_len, b_eff, d_eff)        # trailing-dim fold, no relayout
        pe_w = pe_slice if fold == 1 else jnp.tile(pe_slice, (1, fold))
        pe_v = pe_w.reshape(seq_len, 1, d_eff)
        row_bytes = d_eff * x_isz
        if b_eff * row_bytes <= block_budget_bytes:
            tile_b = b_eff                            # full dim: always layout-legal
        else:
            tile_b = max(8, min(b_eff, (block_budget_bytes // row_bytes // 8) * 8))
        tile_s = max(1, min(seq_len, block_budget_bytes // max(tile_b * row_bytes, 1)))
        # Degenerate-grid guard: >= 2 total grid steps so both v7x TCs get work.
        # tile_s is a leading (non-sublane) block dim, so any size is legal.
        if pl.cdiv(seq_len, tile_s) * pl.cdiv(b_eff, tile_b) < 2 and seq_len > 1:
            tile_s = pl.cdiv(seq_len, 2)
        grid = (pl.cdiv(seq_len, tile_s), pl.cdiv(b_eff, tile_b))  # batch innermost
        in_specs = [
            pl.BlockSpec((tile_s, tile_b, d_eff), lambda i, j: (i, j, 0)),
            # Rank-3 (tile_s, 1, d_eff) pe block: sublane broadcast in-kernel (no
            # materialized temp); index map ignores j -> pe block stays resident
            # across consecutive batch grid steps (no redundant DMA).
            pl.BlockSpec((tile_s, 1, d_eff), lambda i, j: (i, 0, 0)),
        ]
        out_specs = pl.BlockSpec((tile_s, tile_b, d_eff), lambda i, j: (i, j, 0))
        out_shape = jax.ShapeDtypeStruct((seq_len, b_eff, d_eff), out_dtype)
        dims = ("parallel", "parallel")
        x_blk = tile_s * tile_b * d_eff * x_isz
        o_blk = tile_s * tile_b * d_eff * o_isz
        pe_blk = tile_s * d_eff * pe_isz

    call_kwargs = {}
    if donate_x and jnp.dtype(out_dtype) == jnp.dtype(x.dtype):
        call_kwargs["input_output_aliases"] = {0: 0}   # reuse x's HBM for the output

    out = pl.pallas_call(
        _pe_add_kernel,
        out_shape=out_shape,
        grid_spec=pltpu.PrefetchScalarGridSpec(
            num_scalar_prefetch=0,
            grid=grid,
            in_specs=in_specs,
            out_specs=out_specs,
        ),
        compiler_params=pltpu.CompilerParams(
            dimension_semantics=dims,
            vmem_limit_bytes=_vmem_limit(x_blk, o_blk, pe_blk),
        ),
        **call_kwargs,
    )(x_v, pe_v)

    # Dropout in eval mode is identity.
    return out.reshape(seq_len, batch, d_model)


# ---------------------------------------------------------------------------
# Pure-JAX reference for correctness checking
# ---------------------------------------------------------------------------
def positional_encoding_ref(x: jnp.ndarray, pe_table: jnp.ndarray) -> jnp.ndarray:
    return x + pe_table[: x.shape[0], None, :]


if __name__ == "__main__":
    # Small shapes consistent with the module's forward: (seq, batch, d_model)
    seq_len, batch, d_model = 8, 2, 32
    max_len = 64  # small synthetic max_len (module default is 5000)

    key = jax.random.PRNGKey(0)
    x = jax.random.normal(key, (seq_len, batch, d_model), dtype=jnp.float32)

    pe_table = make_positional_encoding_table(d_model, max_len)

    ref = positional_encoding_ref(x, pe_table)

    out = jax.block_until_ready(positional_encoding_forward(x, pe_table))

    assert out.shape == (seq_len, batch, d_model)
    assert out.dtype == ref.dtype
    assert jnp.allclose(out, ref, atol=1e-6, rtol=1e-6), "mismatch vs reference"

    print("KERNEL_OK")
</pallas_src>

<mosaic_0001>
module attributes {stable_mosaic.version = 11 : i64} {
  func.func @_pe_add_kernel(%arg0: i32, %arg1: memref<8x64xf32, #tpu.memory_space<vmem>>, %arg2: memref<8x64xf32, #tpu.memory_space<vmem>>, %arg3: memref<8x64xf32, #tpu.memory_space<vmem>>) attributes {dimension_semantics = [#tpu.dimension_semantics<parallel>], iteration_bounds = array<i64: 1>, scalar_prefetch = 0 : i64, scratch_operands = 0 : i64, tpu.core_type = #tpu.core_type<tc>, window_params = [{transform_indices = @transform_0, window_bounds = array<i64: 8, 64>}, {transform_indices = @transform_1, window_bounds = array<i64: 8, 64>}, {transform_indices = @transform_2, window_bounds = array<i64: 8, 64>}]} {
    %c0 = arith.constant 0 : index
    %c0_0 = arith.constant 0 : index
    %0 = vector.load %arg1[%c0, %c0_0] : memref<8x64xf32, #tpu.memory_space<vmem>>, vector<8x64xf32>
    %c0_1 = arith.constant 0 : index
    %c0_2 = arith.constant 0 : index
    %1 = vector.load %arg2[%c0_1, %c0_2] : memref<8x64xf32, #tpu.memory_space<vmem>>, vector<8x64xf32>
    %2 = arith.addf %0, %1 : vector<8x64xf32>
    %c0_3 = arith.constant 0 : index
    %c0_4 = arith.constant 0 : index
    %3 = vector.load %arg3[%c0_3, %c0_4] : memref<8x64xf32, #tpu.memory_space<vmem>>, vector<8x64xf32>
    tpu.vector_store %arg3[%c0_3, %c0_4], %2 {strides = array<i32>} : memref<8x64xf32, #tpu.memory_space<vmem>>, vector<8x64xf32>,
    return
  }
  func.func @transform_0(%arg0: i32) -> (i32, i32) {
    %c0_i32 = arith.constant 0 : i32
    %c0_i32_0 = arith.constant 0 : i32
    return %arg0, %c0_i32 : i32, i32
  }
  func.func @transform_1(%arg0: i32) -> (i32, i32) {
    %c0_i32 = arith.constant 0 : i32
    %c0_i32_0 = arith.constant 0 : i32
    return %arg0, %c0_i32 : i32, i32
  }
  func.func @transform_2(%arg0: i32) -> (i32, i32) {
    %c0_i32 = arith.constant 0 : i32
    %c0_i32_0 = arith.constant 0 : i32
    return %arg0, %c0_i32 : i32, i32
  }
}

</mosaic_0001>

<llo_original>
// kernel: tpu_custom_call.1
$region0: #{tpu_custom_call.1}
  #allocation0 [shape = 'u32[]', space=smem, size = 0x4, offset = 0x4, fixed_abs, tag = 'smem constant byte address 0x4 - core index']
  #allocation1 [shape = 'u32[144,128]{1,0:T(1,128)}', space=vmem, size = 0x12000, scoped, tag = 'internal scratch']
  %s0 = inlined_call_operand.hbm [shape: f32[8,64], index: 0, kind: input, shape index: {}]
  %s1 = inlined_call_operand.hbm [shape: f32[8,64], index: 1, kind: input, shape index: {}]
  %s2 = inlined_call_operand.hbm [shape: f32[8,64], index: 2, kind: output, shape index: {}]
  %s3 = sld [smem:[#allocation0]]
  $region26: #{tpu_custom_call.1} parent=0
    _
  %s5 = ssub.s32 1, %s3
  %s6 = scalar_select 0, %s5, %s3
  $region1: #{tpu_custom_call.1} parent=0
    #allocation2 [shape = 'u8[4096]{0}', space=vmem, size = 0x1000, scoped, tag = 'input window, operand 0, single buffered']
    #allocation3 [shape = 's32[1]{0}', space=sflag, size = 0x4, scoped, tag = 'scoped memory for tpu_custom_call.1']
    #allocation4 [shape = 's32[1]{0}', space=sflag, size = 0x4, scoped, tag = 'scoped memory for tpu_custom_call.1']
    #allocation5 [shape = 'u8[4096]{0}', space=vmem, size = 0x1000, scoped, tag = 'input window, operand 1, single buffered']
    #allocation6 [shape = 's32[1]{0}', space=sflag, size = 0x4, scoped, tag = 'scoped memory for tpu_custom_call.1']
    #allocation7 [shape = 'u8[4096]{0}', space=vmem, size = 0x1000, scoped, tag = 'output window, operand 0, single buffered']
    %7 = vsyncpa [#allocation3], 0
    %8 = vsyncpa [#allocation6], 0
    %9 = vsyncpa [#allocation4], 0
    // Predicated region
    $region2: #{tpu_custom_call.1} parent=1 // pred_check
      _
    $region3: #{tpu_custom_call.1} parent=1 // pred_check_branch
      %11 = sbr.rel (0) target = $region5
    $region4: #{tpu_custom_call.1} parent=1 // pred_region
      %s13 = ssub.s32 128, 128
      %14 = vsyncadd [#allocation3], %s13
      %s16 = sshll.u32 [#allocation2], 4
      %s17 = int_to_ptr.vmem [resolvable:$true] %s16
      %19 = dma.hbm_to_vmem [thread:$0]  %s0, 128, %s17, [#allocation3]
    $region5: #{tpu_custom_call.1} parent=1 // pred_fallthru
      _
    // Predicated region
    $region6: #{tpu_custom_call.1} parent=1 // pred_check
      _
    $region7: #{tpu_custom_call.1} parent=1 // pred_check_branch
      %21 = sbr.rel (0) target = $region9
    $region8: #{tpu_custom_call.1} parent=1 // pred_region
      %s23 = ssub.s32 128, 128
      %24 = vsyncadd [#allocation6], %s23
      %s26 = sshll.u32 [#allocation5], 4
      %s27 = int_to_ptr.vmem [resolvable:$true] %s26
      %29 = dma.hbm_to_vmem [thread:$0]  %s1, 128, %s27, [#allocation6]
    $region9: #{tpu_custom_call.1} parent=1 // pred_fallthru
      _
    // Predicated region
    $region10: #{tpu_custom_call.1} parent=1 // pred_check
      _
    $region11: #{tpu_custom_call.1} parent=1 // pred_check_branch
      %31 = sbr.rel (0) target = $region13
    $region12: #{tpu_custom_call.1} parent=1 // pred_region
      %32 = dma.done [#allocation3], 128
    $region13: #{tpu_custom_call.1} parent=1 // pred_fallthru
      _
    // Predicated region
    $region14: #{tpu_custom_call.1} parent=1 // pred_check
      _
    $region15: #{tpu_custom_call.1} parent=1 // pred_check_branch
      %34 = sbr.rel (0) target = $region17
    $region16: #{tpu_custom_call.1} parent=1 // pred_region
      %35 = dma.done [#allocation6], 128
    $region17: #{tpu_custom_call.1} parent=1 // pred_fallthru
      _
    %v36 = vld [vmem:[#allocation2] sm:$0xff]
    %v37 = vld [vmem:[#allocation5] sm:$0xff]
    %v38 = vadd.f32 %v36, %v37
    %vm39 = vcmask 523264
    %40 = vst.msk [vmem:[#allocation7] sm:$0xff] %vm39, %v38
    // Predicated region
    $region18: #{tpu_custom_call.1} parent=1 // pred_check
      _
    $region19: #{tpu_custom_call.1} parent=1 // pred_check_branch
      %42 = sbr.rel (0) target = $region21
    $region20: #{tpu_custom_call.1} parent=1 // pred_region
      %s44 = ssub.s32 128, 128
      %45 = vsyncadd [#allocation4], %s44
      %s47 = sshll.u32 [#allocation7], 4
      %s48 = int_to_ptr.vmem [resolvable:$true] %s47
      %50 = dma.vmem_to_hbm [thread:$0]  %s48, 128, %s2, [#allocation4]
    $region21: #{tpu_custom_call.1} parent=1 // pred_fallthru
      _
    // Predicated region
    $region22: #{tpu_custom_call.1} parent=1 // pred_check
      _
    $region23: #{tpu_custom_call.1} parent=1 // pred_check_branch
      %52 = sbr.rel (0) target = $region25
    $region24: #{tpu_custom_call.1} parent=1 // pred_region
      %53 = dma.done [#allocation4], 128
    $region25: #{tpu_custom_call.1} parent=1 // pred_fallthru
      _
    %54 = vsyncpa [#allocation3], 1
    %55 = vsyncpa [#allocation6], 1
    %56 = vsyncpa [#allocation4], 1

</llo_original>
